<compile_context>
chip_gen: v6e
topology: v6e:2x2x1
jax: 0.10.0
libtpu: 0.0.40
codegen_flags: <defaults>
</compile_context>

<pallas_src>
import functools

import jax
import jax.numpy as jnp
from jax.experimental import pallas as pl
from jax.experimental.pallas import tpu as pltpu


def _round_up(x, m):
    return (x + m - 1) // m * m


def _cdiv(a, b):
    return -(-a // b)


def _attention_kernel(x_ref, wqk_ref, bqk_ref, wv_ref, bv_ref, r_ref, s_ref,
                      o_ref, *, mm_dtype):
    # x block: (Bn, F) with F = L * d_model (sequence folded onto the lane axis).
    xb = x_ref[...]
    xb_mm = xb.astype(mm_dtype)     # single in-kernel cast (VPU); no-op if dtypes match

    # Folded lin_q(lin_k(x)), already scaled by 1/sqrt(D):
    #   scores[b, l] = x[b, l*D:(l+1)*D] @ w_qk^T / sqrt(D) + (wq@bk + bq) / sqrt(D)
    scores = jnp.dot(xb_mm, wqk_ref[...],
                     preferred_element_type=jnp.float32) + bqk_ref[...]   # (Bn, L) f32

    # softmax over the sequence axis (lane axis), all in f32.
    m = jnp.max(scores, axis=-1, keepdims=True)                           # (Bn, 1)
    e = jnp.exp(scores - m)                                               # (Bn, L)
    denom = jnp.sum(e, axis=-1, keepdims=True)                            # (Bn, 1)
    attn = e * pl.reciprocal(denom, approx=True)                          # (Bn, L)

    # lin_v applied to every (batch, position) at once: block-diagonal kron(I_L, Wv^T).
    v = jnp.dot(xb_mm, wv_ref[...],
                preferred_element_type=jnp.float32) + bv_ref[...]         # (Bn, F) f32

    # out[b, d] = sum_l attn[b, l] * v[b, l*D + d], done on the MXU (no lane shuffles):
    #   R (L, F): R[l, l*D + d] = 1          S (F, D): S[l*D + d, d] = 1
    attn_exp = jnp.dot(attn, r_ref[...],
                       preferred_element_type=jnp.float32)                # (Bn, F)
    out = jnp.dot(attn_exp * v, s_ref[...],
                  preferred_element_type=jnp.float32)                     # (Bn, D)

    o_ref[...] = out.astype(o_ref.dtype)                                  # (Bn, D)


def attention_layer(x, wq, bq, wk, bk, wv, bv, *, matmul_dtype=None,
                    block_batch=None):
    """Prototype-query attention forward.

    x: (N, L, D).  Weights follow PyTorch nn.Linear convention:
      wq: (1, D), bq: (1,), wk: (D, D), bk: (D,), wv: (D, D), bv: (D,).
    matmul_dtype: optional low-precision dtype (e.g. jnp.bfloat16) for the MXU
      operands -- recommended on v5e, v6e and v7x; accumulation, biases and the
      softmax stay in float32.  The cast happens inside the kernel, so x itself
      is streamed from HBM in its original dtype (pass bf16 x for the full
      bandwidth win).
    Returns (N, D).
    """
    N, L, D = x.shape
    F = L * D
    out_dtype = x.dtype
    f32 = jnp.float32
    mm_dtype = jnp.dtype(matmul_dtype) if matmul_dtype is not None else jnp.dtype(x.dtype)

    inv_sqrt_d = 1.0 / (float(D) ** 0.5)

    # ---- fold lin_q o lin_k into a single affine map, with 1/sqrt(D) baked in ----
    wq_f = wq.astype(f32)                                        # (1, D)
    w_qk = (wq_f @ wk.astype(f32)) * inv_sqrt_d                  # (1, D)
    b_qk = ((wq_f @ bk.astype(f32))[0] + bq.astype(f32)[0]) * inv_sqrt_d   # scalar

    eye_l = jnp.eye(L, dtype=f32)
    wqk_kron = jnp.kron(eye_l, w_qk.T).astype(mm_dtype)          # (F, L)
    wv_bd = jnp.kron(eye_l, wv.astype(f32).T).astype(mm_dtype)   # (F, F)
    bv_t = jnp.tile(bv.astype(f32), L).reshape(1, F)             # (1, F)
    bqk_2 = b_qk.reshape(1, 1)                                   # (1, 1)

    # Constant 0/1 matrices that put the final weighted sum on the MXU.
    r_mat = jnp.kron(eye_l, jnp.ones((1, D), dtype=f32))                    # (L, F)
    s_mat = jnp.kron(jnp.ones((L, 1), dtype=f32), jnp.eye(D, dtype=f32))    # (F, D)

    # x streamed as-is (free contiguous reshape); no wrapper-side astype pass.
    x2 = x.reshape(N, F)

    # ---- batch-block selection --------------------------------------------------
    x_item = jnp.dtype(x.dtype).itemsize
    row_tile = max(8, 32 // x_item)               # sublane tile: 8 rows f32, 16 rows bf16
    if block_batch is None:
        target_bytes = 4 * 1024 * 1024            # ~4 MiB streamed x blocks
        bn_target = (target_bytes // max(1, F * x_item)) // row_tile * row_tile
        bn_target = min(max(row_tile, bn_target), 8192)
    else:
        bn_target = max(row_tile, _round_up(block_batch, row_tile))

    # Pick the step count first, then the block, so tail padding is at most one
    # sublane group per step (avoids e.g. N=4097 padding to 8192 rows).
    n_steps = max(1, _cdiv(N, bn_target))
    bn = _round_up(_cdiv(N, n_steps), row_tile)
    if _cdiv(N, bn) < 2 and N > row_tile:
        # Guarantee >= 2 grid steps so the "parallel" axis can use both v7x cores.
        bn = _round_up(_cdiv(N, 2), row_tile)
    n_pad = _round_up(N, bn)
    if n_pad != N:
        x2 = jnp.pad(x2, ((0, n_pad - N), (0, 0)))   # zero rows: softmax stays finite
    grid = (n_pad // bn,)

    # ---- VMEM budget ------------------------------------------------------------
    try:
        vmem_cap = int(pltpu.get_tpu_info().vmem_capacity_bytes)
    except Exception:
        vmem_cap = 64 * 1024 * 1024               # v7x-safe fallback
    vmem_budget = int(0.75 * vmem_cap)            # <= 48 MiB on v7x, ~96 MiB on v5e/v6e

    mm_item = jnp.dtype(mm_dtype).itemsize
    est = (2 * bn * F * x_item                    # x block, double-buffered
           + 2 * bn * D * 4                       # out block, double-buffered
           + 2 * (F * L + F * F) * mm_item        # kron weights (2 buffers each)
           + 2 * (L * F + F * D + F + 1) * 4      # R, S, bv, bqk
           + 2 * bn * F * 4                       # f32 intermediates (v, attn@R)
           + bn * F * mm_item                     # in-kernel cast of xb (if any)
           + (4 << 20))                           # headroom
    vmem_limit = int(min(vmem_budget, max(est, 16 * 1024 * 1024)))

    kernel = functools.partial(_attention_kernel, mm_dtype=mm_dtype)

    grid_spec = pltpu.PrefetchScalarGridSpec(
        num_scalar_prefetch=0,
        grid=grid,
        in_specs=[
            pl.BlockSpec((bn, F), lambda n: (n, 0)),   # x, fat (Bn, L*D) block
            pl.BlockSpec((F, L), lambda n: (0, 0)),    # kron(I_L, w_qk^T / sqrt(D))
            pl.BlockSpec((1, 1), lambda n: (0, 0)),    # folded, scaled bias
            pl.BlockSpec((F, F), lambda n: (0, 0)),    # kron(I_L, Wv^T)
            pl.BlockSpec((1, F), lambda n: (0, 0)),    # tiled bv
            pl.BlockSpec((L, F), lambda n: (0, 0)),    # R (attn -> per-position expand)
            pl.BlockSpec((F, D), lambda n: (0, 0)),    # S (position-sum collapse)
        ],
        out_specs=pl.BlockSpec((bn, D), lambda n: (n, 0)),
    )

    out = pl.pallas_call(
        kernel,
        out_shape=jax.ShapeDtypeStruct((n_pad, D), out_dtype),
        grid_spec=grid_spec,
        compiler_params=pltpu.CompilerParams(
            dimension_semantics=("parallel",),
            vmem_limit_bytes=vmem_limit),
    )(x2, wqk_kron, bqk_2, wv_bd, bv_t, r_mat, s_mat)

    return out[:N]


def attention_layer_ref(x, wq, bq, wk, bk, wv, bv):
    """Pure-JAX reference mirroring the PyTorch forward."""
    d_model = x.shape[2]
    k = x @ wk.T + bk                       # (N, L, D)
    attn = k @ wq.T + bq                    # (N, L, 1)
    attn = jnp.swapaxes(attn, 1, 2)         # (N, 1, L)
    attn = attn / jnp.sqrt(jnp.float32(d_model))
    attn = jax.nn.softmax(attn, axis=2)
    v = x @ wv.T + bv                       # (N, L, D)
    out = jnp.einsum('nol,nld->nod', attn, v)[:, 0, :]  # (N, D)
    return out


if __name__ == "__main__":
    L, D = 8, 32
    key = jax.random.PRNGKey(0)
    kx, kwq, kbq, kwk, kbk, kwv, kbv, kx2 = jax.random.split(key, 8)

    # PyTorch Linear shapes: weight (out, in), bias (out,)
    bound = 1.0 / (D ** 0.5)
    wq = jax.random.uniform(kwq, (1, D), minval=-bound, maxval=bound, dtype=jnp.float32)
    bq = jax.random.uniform(kbq, (1,), minval=-bound, maxval=bound, dtype=jnp.float32)
    wk = jax.random.uniform(kwk, (D, D), minval=-bound, maxval=bound, dtype=jnp.float32)
    bk = jax.random.uniform(kbk, (D,), minval=-bound, maxval=bound, dtype=jnp.float32)
    wv = jax.random.uniform(kwv, (D, D), minval=-bound, maxval=bound, dtype=jnp.float32)
    bv = jax.random.uniform(kbv, (D,), minval=-bound, maxval=bound, dtype=jnp.float32)

    # --- small shape matching the module spec: N=2, L=8, d_model=32 ---------------
    N = 2
    x = jax.random.normal(kx, (N, L, D), dtype=jnp.float32)
    ref = attention_layer_ref(x, wq, bq, wk, bk, wv, bv)

    # Full-precision path (f32 MXU operands).  Tolerance accommodates the EUP
    # approximate reciprocal used for the softmax denominator.
    out_f32 = jax.block_until_ready(attention_layer(x, wq, bq, wk, bk, wv, bv))
    assert out_f32.shape == (N, D), out_f32.shape
    err = jnp.max(jnp.abs(out_f32 - ref))
    assert jnp.allclose(out_f32, ref, atol=1e-3, rtol=1e-3), f"f32 max err {err}"

    # Bandwidth/MXU-optimized path (bf16 MXU operands via an in-kernel cast,
    # f32 accumulation and softmax) -- recommended on v5e, v6e and v7x.
    out_bf16 = jax.block_until_ready(
        attention_layer(x, wq, bq, wk, bk, wv, bv, matmul_dtype=jnp.bfloat16))
    err_b = jnp.max(jnp.abs(out_bf16 - ref))
    assert jnp.allclose(out_bf16, ref, atol=3e-2, rtol=3e-2), f"bf16 max err {err_b}"

    # --- larger odd batch: exercises multi-step grid + minimal tail padding -------
    N2 = 37
    xl = jax.random.normal(kx2, (N2, L, D), dtype=jnp.float32)
    ref_l = attention_layer_ref(xl, wq, bq, wk, bk, wv, bv)
    out_l = jax.block_until_ready(
        attention_layer(xl, wq, bq, wk, bk, wv, bv, block_batch=16))
    assert out_l.shape == (N2, D), out_l.shape
    err_l = jnp.max(jnp.abs(out_l - ref_l))
    assert jnp.allclose(out_l, ref_l, atol=1e-3, rtol=1e-3), f"multi-step max err {err_l}"

    print("KERNEL_OK")
</pallas_src>

<mosaic_0001>
module attributes {stable_mosaic.version = 11 : i64} {
  func.func @_attention_kernel(%arg0: i32, %arg1: memref<8x256xf32, #tpu.memory_space<vmem>>, %arg2: memref<256x8xf32, #tpu.memory_space<vmem>>, %arg3: memref<1x1xf32, #tpu.memory_space<vmem>>, %arg4: memref<256x256xf32, #tpu.memory_space<vmem>>, %arg5: memref<1x256xf32, #tpu.memory_space<vmem>>, %arg6: memref<8x256xf32, #tpu.memory_space<vmem>>, %arg7: memref<256x32xf32, #tpu.memory_space<vmem>>, %arg8: memref<8x32xf32, #tpu.memory_space<vmem>>) attributes {dimension_semantics = [#tpu.dimension_semantics<parallel>], iteration_bounds = array<i64: 1>, scalar_prefetch = 0 : i64, scratch_operands = 0 : i64, tpu.core_type = #tpu.core_type<tc>, window_params = [{transform_indices = @transform_0, window_bounds = array<i64: 8, 256>}, {pipeline_mode = #tpu.pipeline_mode<synchronous>, transform_indices = @transform_1, window_bounds = array<i64: 256, 8>}, {pipeline_mode = #tpu.pipeline_mode<synchronous>, transform_indices = @transform_2, window_bounds = array<i64: 1, 1>}, {pipeline_mode = #tpu.pipeline_mode<synchronous>, transform_indices = @transform_3, window_bounds = array<i64: 256, 256>}, {pipeline_mode = #tpu.pipeline_mode<synchronous>, transform_indices = @transform_4, window_bounds = array<i64: 1, 256>}, {pipeline_mode = #tpu.pipeline_mode<synchronous>, transform_indices = @transform_5, window_bounds = array<i64: 8, 256>}, {pipeline_mode = #tpu.pipeline_mode<synchronous>, transform_indices = @transform_6, window_bounds = array<i64: 256, 32>}, {transform_indices = @transform_7, window_bounds = array<i64: 8, 32>}]} {
    %c0 = arith.constant 0 : index
    %c0_0 = arith.constant 0 : index
    %0 = vector.load %arg1[%c0, %c0_0] : memref<8x256xf32, #tpu.memory_space<vmem>>, vector<8x256xf32>
    %c0_1 = arith.constant 0 : index
    %c0_2 = arith.constant 0 : index
    %1 = vector.load %arg2[%c0_1, %c0_2] : memref<256x8xf32, #tpu.memory_space<vmem>>, vector<256x8xf32>
    %cst = arith.constant dense<0.000000e+00> : vector<8x8xf32>
    %2 = tpu.matmul %0, %1, %cst {dimension_numbers = #tpu.dot_dimension_numbers<[1], [0], [0], [1], [0, 0, 1, 1], [], []>} : vector<8x256xf32>, vector<256x8xf32>, vector<8x8xf32> -> vector<8x8xf32>
    %c0_3 = arith.constant 0 : index
    %c0_4 = arith.constant 0 : index
    %3 = vector.load %arg3[%c0_3, %c0_4] : memref<1x1xf32, #tpu.memory_space<vmem>>, vector<1x1xf32>
    %4 = vector.broadcast %3 : vector<1x1xf32> to vector<8x8xf32>
    %5 = arith.addf %2, %4 : vector<8x8xf32>
    %cst_5 = arith.constant dense<0xFF800000> : vector<8xf32>
    %6 = vector.multi_reduction <maximumf>, %5, %cst_5 [1] : vector<8x8xf32> to vector<8xf32>
    %7 = vector.shape_cast %6 : vector<8xf32> to vector<8x1xf32>
    %8 = vector.broadcast %7 : vector<8x1xf32> to vector<8x8xf32>
    %9 = arith.subf %5, %8 : vector<8x8xf32>
    %10 = math.exp %9 : vector<8x8xf32>
    %cst_6 = arith.constant dense<0.000000e+00> : vector<8xf32>
    %11 = vector.multi_reduction <add>, %10, %cst_6 [1] : vector<8x8xf32> to vector<8xf32>
    %12 = vector.shape_cast %11 : vector<8xf32> to vector<8x1xf32>
    %13 = tpu.reciprocal %12 {approx = true} : vector<8x1xf32> -> vector<8x1xf32>
    %14 = vector.broadcast %13 : vector<8x1xf32> to vector<8x8xf32>
    %15 = arith.mulf %10, %14 : vector<8x8xf32>
    %c0_7 = arith.constant 0 : index
    %c0_8 = arith.constant 0 : index
    %16 = vector.load %arg4[%c0_7, %c0_8] : memref<256x256xf32, #tpu.memory_space<vmem>>, vector<256x256xf32>
    %cst_9 = arith.constant dense<0.000000e+00> : vector<8x256xf32>
    %17 = tpu.matmul %0, %16, %cst_9 {dimension_numbers = #tpu.dot_dimension_numbers<[1], [0], [0], [1], [0, 0, 1, 1], [], []>} : vector<8x256xf32>, vector<256x256xf32>, vector<8x256xf32> -> vector<8x256xf32>
    %c0_10 = arith.constant 0 : index
    %c0_11 = arith.constant 0 : index
    %18 = vector.load %arg5[%c0_10, %c0_11] : memref<1x256xf32, #tpu.memory_space<vmem>>, vector<1x256xf32>
    %19 = vector.broadcast %18 : vector<1x256xf32> to vector<8x256xf32>
    %20 = arith.addf %17, %19 : vector<8x256xf32>
    %c0_12 = arith.constant 0 : index
    %c0_13 = arith.constant 0 : index
    %21 = vector.load %arg6[%c0_12, %c0_13] : memref<8x256xf32, #tpu.memory_space<vmem>>, vector<8x256xf32>
    %cst_14 = arith.constant dense<0.000000e+00> : vector<8x256xf32>
    %22 = tpu.matmul %15, %21, %cst_14 {dimension_numbers = #tpu.dot_dimension_numbers<[1], [0], [0], [1], [0, 0, 1, 1], [], []>} : vector<8x8xf32>, vector<8x256xf32>, vector<8x256xf32> -> vector<8x256xf32>
    %23 = arith.mulf %22, %20 : vector<8x256xf32>
    %c0_15 = arith.constant 0 : index
    %c0_16 = arith.constant 0 : index
    %24 = vector.load %arg7[%c0_15, %c0_16] : memref<256x32xf32, #tpu.memory_space<vmem>>, vector<256x32xf32>
    %cst_17 = arith.constant dense<0.000000e+00> : vector<8x32xf32>
    %25 = tpu.matmul %23, %24, %cst_17 {dimension_numbers = #tpu.dot_dimension_numbers<[1], [0], [0], [1], [0, 0, 1, 1], [], []>} : vector<8x256xf32>, vector<256x32xf32>, vector<8x32xf32> -> vector<8x32xf32>
    %c0_18 = arith.constant 0 : index
    %c0_19 = arith.constant 0 : index
    %26 = vector.load %arg8[%c0_18, %c0_19] : memref<8x32xf32, #tpu.memory_space<vmem>>, vector<8x32xf32>
    tpu.vector_store %arg8[%c0_18, %c0_19], %25 {strides = array<i32>} : memref<8x32xf32, #tpu.memory_space<vmem>>, vector<8x32xf32>,
    return
  }
  func.func @transform_0(%arg0: i32) -> (i32, i32) {
    %c0_i32 = arith.constant 0 : i32
    %c0_i32_0 = arith.constant 0 : i32
    return %arg0, %c0_i32 : i32, i32
  }
  func.func @transform_1(%arg0: i32) -> (i32, i32) {
    %c0_i32 = arith.constant 0 : i32
    %c0_i32_0 = arith.constant 0 : i32
    %c0_i32_1 = arith.constant 0 : i32
    return %c0_i32, %c0_i32_0 : i32, i32
  }
  func.func @transform_2(%arg0: i32) -> (i32, i32) {
    %c0_i32 = arith.constant 0 : i32
    %c0_i32_0 = arith.constant 0 : i32
    %c0_i32_1 = arith.constant 0 : i32
    return %c0_i32, %c0_i32_0 : i32, i32
  }
  func.func @transform_3(%arg0: i32) -> (i32, i32) {
    %c0_i32 = arith.constant 0 : i32
    %c0_i32_0 = arith.constant 0 : i32
    %c0_i32_1 = arith.constant 0 : i32
    return %c0_i32, %c0_i32_0 : i32, i32
  }
  func.func @transform_4(%arg0: i32) -> (i32, i32) {
    %c0_i32 = arith.constant 0 : i32
    %c0_i32_0 = arith.constant 0 : i32
    %c0_i32_1 = arith.constant 0 : i32
    return %c0_i32, %c0_i32_0 : i32, i32
  }
  func.func @transform_5(%arg0: i32) -> (i32, i32) {
    %c0_i32 = arith.constant 0 : i32
    %c0_i32_0 = arith.constant 0 : i32
    %c0_i32_1 = arith.constant 0 : i32
    return %c0_i32, %c0_i32_0 : i32, i32
  }
  func.func @transform_6(%arg0: i32) -> (i32, i32) {
    %c0_i32 = arith.constant 0 : i32
    %c0_i32_0 = arith.constant 0 : i32
    %c0_i32_1 = arith.constant 0 : i32
    return %c0_i32, %c0_i32_0 : i32, i32
  }
  func.func @transform_7(%arg0: i32) -> (i32, i32) {
    %c0_i32 = arith.constant 0 : i32
    %c0_i32_0 = arith.constant 0 : i32
    return %arg0, %c0_i32 : i32, i32
  }
}

</mosaic_0001>

<llo_original>
// kernel: tpu_custom_call.1
$region0: #{tpu_custom_call.1}
  #allocation0 [shape = 'u32[]', space=smem, size = 0x4, offset = 0x4, fixed_abs, tag = 'smem constant byte address 0x4 - core index']
  #allocation1 [shape = 'u32[144,128]{1,0:T(1,128)}', space=vmem, size = 0x12000, scoped, tag = 'internal scratch']
  #allocation2 [shape = 'f32[1,1]{1,0:T(1,128)S(1)}', space=vmem, size = 0x200, scoped, tag = 'scoped memory for tpu_custom_call.1']
  %s0 = inlined_call_operand.vmem [shape: f32[8,256], index: 0, kind: input, shape index: {}]
  %s1 = inlined_call_operand.vmem [shape: f32[256,8], index: 1, kind: input, shape index: {}]
  %s2 = inlined_call_operand.<no memory space> [shape: f32[1,1], index: 2, kind: input, shape index: {}]
  %s3 = inlined_call_operand.vmem [shape: f32[256,256], index: 3, kind: input, shape index: {}]
  %s4 = inlined_call_operand.vmem [shape: f32[1,256], index: 4, kind: input, shape index: {}]
  %s5 = inlined_call_operand.hbm [shape: f32[8,256], index: 5, kind: input, shape index: {}]
  %s6 = inlined_call_operand.vmem [shape: f32[256,32], index: 6, kind: input, shape index: {}]
  %s7 = inlined_call_operand.hbm [shape: f32[8,32], index: 7, kind: output, shape index: {}]
  %s8 = sld [smem:[#allocation0]]
  $region42: #{tpu_custom_call.1} parent=0
    _
  %s10 = ssub.s32 1, %s8
  %s11 = scalar_select 0, %s10, %s8
  %v12 = vstv %s2
  %13 = vst [vmem:[#allocation2] sm:$0x1] %v12
  $region1: #{tpu_custom_call.1} parent=0
    #allocation3 [shape = 'u8[8192]{0}', space=vmem, size = 0x2000, scoped, tag = 'input window, operand 5, single buffered']
    #allocation4 [shape = 's32[1]{0}', space=sflag, size = 0x4, scoped, tag = 'scoped memory for tpu_custom_call.1']
    #allocation5 [shape = 's32[1]{0}', space=sflag, size = 0x4, scoped, tag = 'scoped memory for tpu_custom_call.1']
    #allocation6 [shape = 'u8[4096]{0}', space=vmem, size = 0x1000, scoped, tag = 'output window, operand 0, single buffered']
    %14 = vsyncpa [#allocation4], 0
    %15 = vsyncpa [#allocation5], 0
    // Predicated region
    $region2: #{tpu_custom_call.1} parent=1 // pred_check
      _
    $region3: #{tpu_custom_call.1} parent=1 // pred_check_branch
      %17 = sbr.rel (0) target = $region5
    $region4: #{tpu_custom_call.1} parent=1 // pred_region
      _
    $region5: #{tpu_custom_call.1} parent=1 // pred_fallthru
      _
    // Predicated region
    $region6: #{tpu_custom_call.1} parent=1 // pred_check
      _
    $region7: #{tpu_custom_call.1} parent=1 // pred_check_branch
      %19 = sbr.rel (0) target = $region9
    $region8: #{tpu_custom_call.1} parent=1 // pred_region
      _
    $region9: #{tpu_custom_call.1} parent=1 // pred_fallthru
      _
    // Predicated region
    $region10: #{tpu_custom_call.1} parent=1 // pred_check
      _
    $region11: #{tpu_custom_call.1} parent=1 // pred_check_branch
      %21 = sbr.rel (0) target = $region13
    $region12: #{tpu_custom_call.1} parent=1 // pred_region
      _
    $region13: #{tpu_custom_call.1} parent=1 // pred_fallthru
      _
    // Predicated region
    $region14: #{tpu_custom_call.1} parent=1 // pred_check
      _
    $region15: #{tpu_custom_call.1} parent=1 // pred_check_branch
      %23 = sbr.rel (0) target = $region17
    $region16: #{tpu_custom_call.1} parent=1 // pred_region
      _
    $region17: #{tpu_custom_call.1} parent=1 // pred_fallthru
      _
    // Predicated region
    $region18: #{tpu_custom_call.1} parent=1 // pred_check
      _
    $region19: #{tpu_custom_call.1} parent=1 // pred_check_branch
      %25 = sbr.rel (0) target = $region21
    $region20: #{tpu_custom_call.1} parent=1 // pred_region
      _
    $region21: #{tpu_custom_call.1} parent=1 // pred_fallthru
      _
    // Predicated region
    $region22: #{tpu_custom_call.1} parent=1 // pred_check
      _
    $region23: #{tpu_custom_call.1} parent=1 // pred_check_branch
      %27 = sbr.rel (0) target = $region25
    $region24: #{tpu_custom_call.1} parent=1 // pred_region
      %s29 = ssub.s32 256, 256
      %30 = vsyncadd [#allocation4], %s29
      %s32 = sshll.u32 [#allocation3], 4
      %s33 = int_to_ptr.vmem [resolvable:$true] %s32
      %35 = dma.hbm_to_vmem [thread:$0]  %s5, 256, %s33, [#allocation4]
    $region25: #{tpu_custom_call.1} parent=1 // pred_fallthru
      _
    // Predicated region
    $region26: #{tpu_custom_call.1} parent=1 // pred_check
      _
    $region27: #{tpu_custom_call.1} parent=1 // pred_check_branch
      %37 = sbr.rel (0) target = $region29
    $region28: #{tpu_custom_call.1} parent=1 // pred_region
      _
    $region29: #{tpu_custom_call.1} parent=1 // pred_fallthru
      _
    // Predicated region
    $region30: #{tpu_custom_call.1} parent=1 // pred_check
      _
    $region31: #{tpu_custom_call.1} parent=1 // pred_check_branch
      %39 = sbr.rel (0) target = $region33
    $region32: #{tpu_custom_call.1} parent=1 // pred_region
      %40 = dma.done [#allocation4], 256
    $region33: #{tpu_custom_call.1} parent=1 // pred_fallthru
      _
    %v41 = vld [vmem:[%s0] sm:$0xff]
    %v42 = vld [vmem:[%s0 + $0x8] sm:$0xff]
    %v43 = vld [vmem:[%s1] sm:$0xff]
    %v44 = vld [vmem:[%s1 + $0x8] sm:$0xff]
    %v45 = vld [vmem:[%s1 + $0x10] sm:$0xff]
    %v46 = vld [vmem:[%s1 + $0x18] sm:$0xff]
    %v47 = vld [vmem:[%s1 + $0x20] sm:$0xff]
    %v48 = vld [vmem:[%s1 + $0x28] sm:$0xff]
    %v49 = vld [vmem:[%s1 + $0x30] sm:$0xff]
    %v50 = vld [vmem:[%s1 + $0x38] sm:$0xff]
    %v51 = vld [vmem:[%s1 + $0x40] sm:$0xff]
    %v52 = vld [vmem:[%s1 + $0x48] sm:$0xff]
    %v53 = vld [vmem:[%s1 + $0x50] sm:$0xff]
    %v54 = vld [vmem:[%s1 + $0x58] sm:$0xff]
    %v55 = vld [vmem:[%s1 + $0x60] sm:$0xff]
    %v56 = vld [vmem:[%s1 + $0x68] sm:$0xff]
    %v57 = vld [vmem:[%s1 + $0x70] sm:$0xff]
    %v58 = vld [vmem:[%s1 + $0x78] sm:$0xff]
    %v59 = vld [vmem:[%s1 + $0x80] sm:$0xff]
    %v60 = vld [vmem:[%s1 + $0x88] sm:$0xff]
    %v61 = vld [vmem:[%s1 + $0x90] sm:$0xff]
    %v62 = vld [vmem:[%s1 + $0x98] sm:$0xff]
    %v63 = vld [vmem:[%s1 + $0xa0] sm:$0xff]
    %v64 = vld [vmem:[%s1 + $0xa8] sm:$0xff]
    %v65 = vld [vmem:[%s1 + $0xb0] sm:$0xff]
    %v66 = vld [vmem:[%s1 + $0xb8] sm:$0xff]
    %v67 = vld [vmem:[%s1 + $0xc0] sm:$0xff]
    %v68 = vld [vmem:[%s1 + $0xc8] sm:$0xff]
    %v69 = vld [vmem:[%s1 + $0xd0] sm:$0xff]
    %v70 = vld [vmem:[%s1 + $0xd8] sm:$0xff]
    %v71 = vld [vmem:[%s1 + $0xe0] sm:$0xff]
    %v72 = vld [vmem:[%s1 + $0xe8] sm:$0xff]
    %v73 = vld [vmem:[%s1 + $0xf0] sm:$0xff]
    %v74 = vld [vmem:[%s1 + $0xf8] sm:$0xff]
    %v75 = vld [vmem:[#allocation2] sm:$0x1]
    %v77 = vlaneseq
    %v78 = vshrl.u32 %v77, 7
    %v79 = vsub.s32 0, %v78
    %v80 = vrot.slane %v75, %v79
    %81 = vset.pattern.permute.xlu0 0
    %82 = vperm.xlu0 %81, %v80
    %v83 = vpop.permute.xlu0 %82
    %85 = vmatprep.subr.mxu0 0.0
    %86 = vmatpush1.msra.mxu0 %v58
    %87 = vmatprep.subr.mxu0 0.0
    %88 = vmatpush1.msra.mxu0 %v57
    %89 = vmatprep.subr.mxu0 0.0
    %90 = vmatpush1.msra.mxu0 %v56
    %91 = vmatprep.subr.mxu0 0.0
    %92 = vmatpush1.msra.mxu0 %v55
    %93 = vmatprep.subr.mxu0 0.0
    %94 = vmatpush1.msra.mxu0 %v54
    %95 = vmatprep.subr.mxu0 0.0
    %96 = vmatpush1.msra.mxu0 %v53
    %97 = vmatprep.subr.mxu0 0.0
    %98 = vmatpush1.msra.mxu0 %v52
    %99 = vmatprep.subr.mxu0 0.0
    %100 = vmatpush1.msra.mxu0 %v51
    %101 = vmatprep.subr.mxu0 0.0
    %102 = vmatpush1.msra.mxu0 %v50
    %103 = vmatprep.subr.mxu0 0.0
    %104 = vmatpush1.msra.mxu0 %v49
    %105 = vmatprep.subr.mxu0 0.0
    %106 = vmatpush1.msra.mxu0 %v48
    %107 = vmatprep.subr.mxu0 0.0
    %108 = vmatpush1.msra.mxu0 %v47
    %109 = vmatprep.subr.mxu0 0.0
    %110 = vmatpush1.msra.mxu0 %v46
    %111 = vmatprep.subr.mxu0 0.0
    %112 = vmatpush1.msra.mxu0 %v45
    %113 = vmatprep.subr.mxu0 0.0
    %114 = vmatpush1.msra.mxu0 %v44
    %115 = vmatprep.subr.mxu0 0.0
    %116 = vmatpush1.msra.mxu0 %v43
    %117 = vmatprep.subr.mxu0 0.0
    %118 = vmatpush2.msra.mxu0 %v74
    %119 = vmatprep.subr.mxu0 0.0
    %120 = vmatpush2.msra.mxu0 %v73
    %121 = vmatprep.subr.mxu0 0.0
    %122 = vmatpush2.msra.mxu0 %v72
    %123 = vmatprep.subr.mxu0 0.0
    %124 = vmatpush2.msra.mxu0 %v71
    %125 = vmatprep.subr.mxu0 0.0
    %126 = vmatpush2.msra.mxu0 %v70
    %127 = vmatprep.subr.mxu0 0.0
    %128 = vmatpush2.msra.mxu0 %v69
    %129 = vmatprep.subr.mxu0 0.0
    %130 = vmatpush2.msra.mxu0 %v68
    %131 = vmatprep.subr.mxu0 0.0
    %132 = vmatpush2.msra.mxu0 %v67
    %133 = vmatprep.subr.mxu0 0.0
    %134 = vmatpush2.msra.mxu0 %v66
    %135 = vmatprep.subr.mxu0 0.0
    %136 = vmatpush2.msra.mxu0 %v65
    %137 = vmatprep.subr.mxu0 0.0
    %138 = vmatpush2.msra.mxu0 %v64
    %139 = vmatprep.subr.mxu0 0.0
    %140 = vmatpush2.msra.mxu0 %v63
    %141 = vmatprep.subr.mxu0 0.0
    %142 = vmatpush2.msra.mxu0 %v62
    %143 = vmatprep.subr.mxu0 0.0
    %144 = vmatpush2.msra.mxu0 %v61
    %145 = vmatprep.subr.mxu0 0.0
    %146 = vmatpush2.msra.mxu0 %v60
    %147 = vmatprep.subr.mxu0 0.0
    %148 = vmatpush2.msra.mxu0 %v59
    %149 = vmatprep.mubr.f32.mxu0 %v42
    %150 = vmatmul.mubr.f32.gmra.mxu0 %v41
    %v151 = vpop.f32.mrf.mxu0
    %v152 = vadd.f32 %v83, %v151
    %v153 = vpop.f32.mrf.mxu0
    %154 = vdwg.mxu0
    %vm155 = vcmask 64512
    %v156 = vsel %vm155, %v152, -inf
    %157 = vmax.xlane.f32.xlu0 %v156
    %v158 = vpop.xlane.xlu0 %157
    %v159 = vsub.f32 %v152, %v158
    %v160 = vmul.f32 %v159, 1.442695
    %v161 = vpow.pop %v160
    %v162 = vsel %vm155, %v161, 0.0
    %163 = vadd.xlane.f32.xlu0 %v162
    %v164 = vpop.xlane.xlu0 %163
    %v165 = vrcp.pop %v164
    %v166 = vmul.f32 %v161, %v165
    %v167 = vld [vmem:[%s3] sm:$0xff]
    %v168 = vld [vmem:[%s3 + $0x8] sm:$0xff]
    %v169 = vld [vmem:[%s3 + $0x10] sm:$0xff]
    %v170 = vld [vmem:[%s3 + $0x18] sm:$0xff]
    %v171 = vld [vmem:[%s3 + $0x20] sm:$0xff]
    %v172 = vld [vmem:[%s3 + $0x28] sm:$0xff]
    %v173 = vld [vmem:[%s3 + $0x30] sm:$0xff]
    %v174 = vld [vmem:[%s3 + $0x38] sm:$0xff]
    %v175 = vld [vmem:[%s3 + $0x40] sm:$0xff]
    %v176 = vld [vmem:[%s3 + $0x48] sm:$0xff]
    %v177 = vld [vmem:[%s3 + $0x50] sm:$0xff]
    %v178 = vld [vmem:[%s3 + $0x58] sm:$0xff]
    %v179 = vld [vmem:[%s3 + $0x60] sm:$0xff]
    %v180 = vld [vmem:[%s3 + $0x68] sm:$0xff]
    %v181 = vld [vmem:[%s3 + $0x70] sm:$0xff]
    %v182 = vld [vmem:[%s3 + $0x78] sm:$0xff]
    %v183 = vld [vmem:[%s3 + $0x80] sm:$0xff]
    %v184 = vld [vmem:[%s3 + $0x88] sm:$0xff]
    %v185 = vld [vmem:[%s3 + $0x90] sm:$0xff]
    %v186 = vld [vmem:[%s3 + $0x98] sm:$0xff]
    %v187 = vld [vmem:[%s3 + $0xa0] sm:$0xff]
    %v188 = vld [vmem:[%s3 + $0xa8] sm:$0xff]
    %v189 = vld [vmem:[%s3 + $0xb0] sm:$0xff]
    %v190 = vld [vmem:[%s3 + $0xb8] sm:$0xff]
    %v191 = vld [vmem:[%s3 + $0xc0] sm:$0xff]
    %v192 = vld [vmem:[%s3 + $0xc8] sm:$0xff]
    %v193 = vld [vmem:[%s3 + $0xd0] sm:$0xff]
    %v194 = vld [vmem:[%s3 + $0xd8] sm:$0xff]
    %v195 = vld [vmem:[%s3 + $0xe0] sm:$0xff]
    %v196 = vld [vmem:[%s3 + $0xe8] sm:$0xff]
    %v197 = vld [vmem:[%s3 + $0xf0] sm:$0xff]
    %v198 = vld [vmem:[%s3 + $0xf8] sm:$0xff]
    %v199 = vld [vmem:[%s3 + $0x100] sm:$0xff]
    %v200 = vld [vmem:[%s3 + $0x108] sm:$0xff]
    %v201 = vld [vmem:[%s3 + $0x110] sm:$0xff]
    %v202 = vld [vmem:[%s3 + $0x118] sm:$0xff]
    %v203 = vld [vmem:[%s3 + $0x120] sm:$0xff]
    %v204 = vld [vmem:[%s3 + $0x128] sm:$0xff]
    %v205 = vld [vmem:[%s3 + $0x130] sm:$0xff]
    %v206 = vld [vmem:[%s3 + $0x138] sm:$0xff]
    %v207 = vld [vmem:[%s3 + $0x140] sm:$0xff]
    %v208 = vld [vmem:[%s3 + $0x148] sm:$0xff]
    %v209 = vld [vmem:[%s3 + $0x150] sm:$0xff]
    %v210 = vld [vmem:[%s3 + $0x158] sm:$0xff]
    %v211 = vld [vmem:[%s3 + $0x160] sm:$0xff]
    %v212 = vld [vmem:[%s3 + $0x168] sm:$0xff]
    %v213 = vld [vmem:[%s3 + $0x170] sm:$0xff]
    %v214 = vld [vmem:[%s3 + $0x178] sm:$0xff]
    %v215 = vld [vmem:[%s3 + $0x180] sm:$0xff]
    %v216 = vld [vmem:[%s3 + $0x188] sm:$0xff]
    %v217 = vld [vmem:[%s3 + $0x190] sm:$0xff]
    %v218 = vld [vmem:[%s3 + $0x198] sm:$0xff]
    %v219 = vld [vmem:[%s3 + $0x1a0] sm:$0xff]
    %v220 = vld [vmem:[%s3 + $0x1a8] sm:$0xff]
    %v221 = vld [vmem:[%s3 + $0x1b0] sm:$0xff]
    %v222 = vld [vmem:[%s3 + $0x1b8] sm:$0xff]
    %v223 = vld [vmem:[%s3 + $0x1c0] sm:$0xff]
    %v224 = vld [vmem:[%s3 + $0x1c8] sm:$0xff]
    %v225 = vld [vmem:[%s3 + $0x1d0] sm:$0xff]
    %v226 = vld [vmem:[%s3 + $0x1d8] sm:$0xff]
    %v227 = vld [vmem:[%s3 + $0x1e0] sm:$0xff]
    %v228 = vld [vmem:[%s3 + $0x1e8] sm:$0xff]
    %v229 = vld [vmem:[%s3 + $0x1f0] sm:$0xff]
    %v230 = vld [vmem:[%s3 + $0x1f8] sm:$0xff]
    %v231 = vld [vmem:[%s4] sm:$0x3]
    %v233 = vlaneseq
    %v234 = vshrl.u32 %v233, 7
    %v235 = vsub.s32 0, %v234
    %v236 = vrot.slane %v231, %v235
    %v237 = vlaneseq
    %v238 = vshrl.u32 %v237, 7
    %v239 = vsub.s32 1, %v238
    %v240 = vrot.slane %v231, %v239
    %243 = vmatprep.subr.mxu0 %v198
    %244 = vmatpush1.msra.mxu0 %v197
    %245 = vmatprep.subr.mxu0 %v196
    %246 = vmatpush1.msra.mxu0 %v195
    %247 = vmatprep.subr.mxu0 %v194
    %248 = vmatpush1.msra.mxu0 %v193
    %249 = vmatprep.subr.mxu0 %v192
    %250 = vmatpush1.msra.mxu0 %v191
    %251 = vmatprep.subr.mxu0 %v190
    %252 = vmatpush1.msra.mxu0 %v189
    %253 = vmatprep.subr.mxu0 %v188
    %254 = vmatpush1.msra.mxu0 %v187
    %255 = vmatprep.subr.mxu0 %v186
    %256 = vmatpush1.msra.mxu0 %v185
    %257 = vmatprep.subr.mxu0 %v184
    %258 = vmatpush1.msra.mxu0 %v183
    %259 = vmatprep.subr.mxu0 %v182
    %260 = vmatpush1.msra.mxu0 %v181
    %261 = vmatprep.subr.mxu0 %v180
    %262 = vmatpush1.msra.mxu0 %v179
    %263 = vmatprep.subr.mxu0 %v178
    %264 = vmatpush1.msra.mxu0 %v177
    %265 = vmatprep.subr.mxu0 %v176
    %266 = vmatpush1.msra.mxu0 %v175
    %267 = vmatprep.subr.mxu0 %v174
    %268 = vmatpush1.msra.mxu0 %v173
    %269 = vmatprep.subr.mxu0 %v172
    %270 = vmatpush1.msra.mxu0 %v171
    %271 = vmatprep.subr.mxu0 %v170
    %272 = vmatpush1.msra.mxu0 %v169
    %273 = vmatprep.subr.mxu0 %v168
    %274 = vmatpush1.msra.mxu0 %v167
    %275 = vmatprep.subr.mxu0 %v230
    %276 = vmatpush2.msra.mxu0 %v229
    %277 = vmatprep.subr.mxu0 %v228
    %278 = vmatpush2.msra.mxu0 %v227
    %279 = vmatprep.subr.mxu0 %v226
    %280 = vmatpush2.msra.mxu0 %v225
    %281 = vmatprep.subr.mxu0 %v224
    %282 = vmatpush2.msra.mxu0 %v223
    %283 = vmatprep.subr.mxu0 %v222
    %284 = vmatpush2.msra.mxu0 %v221
    %285 = vmatprep.subr.mxu0 %v220
    %286 = vmatpush2.msra.mxu0 %v219
    %287 = vmatprep.subr.mxu0 %v218
    %288 = vmatpush2.msra.mxu0 %v217
    %289 = vmatprep.subr.mxu0 %v216
    %290 = vmatpush2.msra.mxu0 %v215
    %291 = vmatprep.subr.mxu0 %v214
    %292 = vmatpush2.msra.mxu0 %v213
    %293 = vmatprep.subr.mxu0 %v212
    %294 = vmatpush2.msra.mxu0 %v211
    %295 = vmatprep.subr.mxu0 %v210
    %296 = vmatpush2.msra.mxu0 %v209
    %297 = vmatprep.subr.mxu0 %v208
    %298 = vmatpush2.msra.mxu0 %v207
    %299 = vmatprep.subr.mxu0 %v206
    %300 = vmatpush2.msra.mxu0 %v205
    %301 = vmatprep.subr.mxu0 %v204
    %302 = vmatpush2.msra.mxu0 %v203
    %303 = vmatprep.subr.mxu0 %v202
    %304 = vmatpush2.msra.mxu0 %v201
    %305 = vmatprep.subr.mxu0 %v200
    %306 = vmatpush2.msra.mxu0 %v199
    %307 = vmatprep.mubr.f32.mxu0 %v42
    %308 = vmatmul.mubr.f32.gmra.mxu0 %v41
    %v309 = vpop.f32.mrf.mxu0
    %v310 = vadd.f32 %v236, %v309
    %v311 = vpop.f32.mrf.mxu0
    %v312 = vadd.f32 %v240, %v311
    %313 = vdwg.mxu0
    %v314 = vld [vmem:[#allocation3] sm:$0xff]
    %v315 = vld [vmem:[#allocation3 + $0x8] sm:$0xff]
    %v317 = vsel %vm155, %v166, 0
    %319 = vmatprep.subr.mxu0 0.0
    %320 = vmatpush1.msra.mxu0 0.0
    %321 = vmatprep.subr.mxu0 0.0
    %322 = vmatpush1.msra.mxu0 0.0
    %323 = vmatprep.subr.mxu0 0.0
    %324 = vmatpush1.msra.mxu0 0.0
    %325 = vmatprep.subr.mxu0 0.0
    %326 = vmatpush1.msra.mxu0 0.0
    %327 = vmatprep.subr.mxu0 0.0
    %328 = vmatpush1.msra.mxu0 0.0
    %329 = vmatprep.subr.mxu0 0.0
    %330 = vmatpush1.msra.mxu0 0.0
    %331 = vmatprep.subr.mxu0 0.0
    %332 = vmatpush1.msra.mxu0 0.0
    %333 = vmatprep.subr.mxu0 0.0
    %334 = vmatpush1.msra.mxu0 0.0
    %335 = vmatprep.subr.mxu0 0.0
    %336 = vmatpush1.msra.mxu0 0.0
    %337 = vmatprep.subr.mxu0 0.0
    %338 = vmatpush1.msra.mxu0 0.0
    %339 = vmatprep.subr.mxu0 0.0
    %340 = vmatpush1.msra.mxu0 0.0
    %341 = vmatprep.subr.mxu0 0.0
    %342 = vmatpush1.msra.mxu0 0.0
    %343 = vmatprep.subr.mxu0 0.0
    %344 = vmatpush1.msra.mxu0 0.0
    %345 = vmatprep.subr.mxu0 0.0
    %346 = vmatpush1.msra.mxu0 0.0
    %347 = vmatprep.subr.mxu0 0.0
    %348 = vmatpush1.msra.mxu0 0.0
    %349 = vmatprep.subr.mxu0 %v315
    %350 = vmatpush1.msra.mxu0 %v314
    %351 = vmatprep.subr.mxu0 0.0
    %352 = vmatpush2.msra.mxu0 0.0
    %353 = vmatprep.subr.mxu0 0.0
    %354 = vmatpush2.msra.mxu0 0.0
    %355 = vmatprep.subr.mxu0 0.0
    %356 = vmatpush2.msra.mxu0 0.0
    %357 = vmatprep.subr.mxu0 0.0
    %358 = vmatpush2.msra.mxu0 0.0
    %359 = vmatprep.subr.mxu0 0.0
    %360 = vmatpush2.msra.mxu0 0.0
    %361 = vmatprep.subr.mxu0 0.0
    %362 = vmatpush2.msra.mxu0 0.0
    %363 = vmatprep.subr.mxu0 0.0
    %364 = vmatpush2.msra.mxu0 0.0
    %365 = vmatprep.subr.mxu0 0.0
    %366 = vmatpush2.msra.mxu0 0.0
    %367 = vmatprep.subr.mxu0 0.0
    %368 = vmatpush2.msra.mxu0 0.0
    %369 = vmatprep.subr.mxu0 0.0
    %370 = vmatpush2.msra.mxu0 0.0
    %371 = vmatprep.subr.mxu0 0.0
    %372 = vmatpush2.msra.mxu0 0.0
    %373 = vmatprep.subr.mxu0 0.0
    %374 = vmatpush2.msra.mxu0 0.0
    %375 = vmatprep.subr.mxu0 0.0
    %376 = vmatpush2.msra.mxu0 0.0
    %377 = vmatprep.subr.mxu0 0.0
    %378 = vmatpush2.msra.mxu0 0.0
    %379 = vmatprep.subr.mxu0 0.0
    %380 = vmatpush2.msra.mxu0 0.0
    %381 = vmatprep.subr.mxu0 0.0
    %382 = vmatpush2.msra.mxu0 0.0
    %383 = vmatprep.mubr.f32.mxu0 0.0
    %384 = vmatmul.mubr.f32.gmra.mxu0 %v317
    %v385 = vpop.f32.mrf.mxu0
    %v386 = vadd.f32 0.0, %v385
    %v387 = vpop.f32.mrf.mxu0
    %v388 = vadd.f32 0.0, %v387
    %389 = vdwg.mxu0
    %v390 = vmul.f32 %v386, %v310
    %v391 = vmul.f32 %v388, %v312
    %v392 = vld [vmem:[%s6] sm:$0xff]
    %v393 = vld [vmem:[%s6 + $0x8] sm:$0xff]
    %v394 = vld [vmem:[%s6 + $0x10] sm:$0xff]
    %v395 = vld [vmem:[%s6 + $0x18] sm:$0xff]
    %v396 = vld [vmem:[%s6 + $0x20] sm:$0xff]
    %v397 = vld [vmem:[%s6 + $0x28] sm:$0xff]
    %v398 = vld [vmem:[%s6 + $0x30] sm:$0xff]
    %v399 = vld [vmem:[%s6 + $0x38] sm:$0xff]
    %v400 = vld [vmem:[%s6 + $0x40] sm:$0xff]
    %v401 = vld [vmem:[%s6 + $0x48] sm:$0xff]
    %v402 = vld [vmem:[%s6 + $0x50] sm:$0xff]
    %v403 = vld [vmem:[%s6 + $0x58] sm:$0xff]
    %v404 = vld [vmem:[%s6 + $0x60] sm:$0xff]
    %v405 = vld [vmem:[%s6 + $0x68] sm:$0xff]
    %v406 = vld [vmem:[%s6 + $0x70] sm:$0xff]
    %v407 = vld [vmem:[%s6 + $0x78] sm:$0xff]
    %v408 = vld [vmem:[%s6 + $0x80] sm:$0xff]
    %v409 = vld [vmem:[%s6 + $0x88] sm:$0xff]
    %v410 = vld [vmem:[%s6 + $0x90] sm:$0xff]
    %v411 = vld [vmem:[%s6 + $0x98] sm:$0xff]
    %v412 = vld [vmem:[%s6 + $0xa0] sm:$0xff]
    %v413 = vld [vmem:[%s6 + $0xa8] sm:$0xff]
    %v414 = vld [vmem:[%s6 + $0xb0] sm:$0xff]
    %v415 = vld [vmem:[%s6 + $0xb8] sm:$0xff]
    %v416 = vld [vmem:[%s6 + $0xc0] sm:$0xff]
    %v417 = vld [vmem:[%s6 + $0xc8] sm:$0xff]
    %v418 = vld [vmem:[%s6 + $0xd0] sm:$0xff]
    %v419 = vld [vmem:[%s6 + $0xd8] sm:$0xff]
    %v420 = vld [vmem:[%s6 + $0xe0] sm:$0xff]
    %v421 = vld [vmem:[%s6 + $0xe8] sm:$0xff]
    %v422 = vld [vmem:[%s6 + $0xf0] sm:$0xff]
    %v423 = vld [vmem:[%s6 + $0xf8] sm:$0xff]
    %424 = vmatprep.subr.mxu0 0.0
    %425 = vmatpush1.msra.mxu0 %v407
    %426 = vmatprep.subr.mxu0 0.0
    %427 = vmatpush1.msra.mxu0 %v406
    %428 = vmatprep.subr.mxu0 0.0
    %429 = vmatpush1.msra.mxu0 %v405
    %430 = vmatprep.subr.mxu0 0.0
    %431 = vmatpush1.msra.mxu0 %v404
    %432 = vmatprep.subr.mxu0 0.0
    %433 = vmatpush1.msra.mxu0 %v403
    %434 = vmatprep.subr.mxu0 0.0
    %435 = vmatpush1.msra.mxu0 %v402
    %436 = vmatprep.subr.mxu0 0.0
    %437 = vmatpush1.msra.mxu0 %v401
    %438 = vmatprep.subr.mxu0 0.0
    %439 = vmatpush1.msra.mxu0 %v400
    %440 = vmatprep.subr.mxu0 0.0
    %441 = vmatpush1.msra.mxu0 %v399
    %442 = vmatprep.subr.mxu0 0.0
    %443 = vmatpush1.msra.mxu0 %v398
    %444 = vmatprep.subr.mxu0 0.0
    %445 = vmatpush1.msra.mxu0 %v397
    %446 = vmatprep.subr.mxu0 0.0
    %447 = vmatpush1.msra.mxu0 %v396
    %448 = vmatprep.subr.mxu0 0.0
    %449 = vmatpush1.msra.mxu0 %v395
    %450 = vmatprep.subr.mxu0 0.0
    %451 = vmatpush1.msra.mxu0 %v394
    %452 = vmatprep.subr.mxu0 0.0
    %453 = vmatpush1.msra.mxu0 %v393
    %454 = vmatprep.subr.mxu0 0.0
    %455 = vmatpush1.msra.mxu0 %v392
    %456 = vmatprep.subr.mxu0 0.0
    %457 = vmatpush2.msra.mxu0 %v423
    %458 = vmatprep.subr.mxu0 0.0
    %459 = vmatpush2.msra.mxu0 %v422
    %460 = vmatprep.subr.mxu0 0.0
    %461 = vmatpush2.msra.mxu0 %v421
    %462 = vmatprep.subr.mxu0 0.0
    %463 = vmatpush2.msra.mxu0 %v420
    %464 = vmatprep.subr.mxu0 0.0
    %465 = vmatpush2.msra.mxu0 %v419
    %466 = vmatprep.subr.mxu0 0.0
    %467 = vmatpush2.msra.mxu0 %v418
    %468 = vmatprep.subr.mxu0 0.0
    %469 = vmatpush2.msra.mxu0 %v417
    %470 = vmatprep.subr.mxu0 0.0
    %471 = vmatpush2.msra.mxu0 %v416
    %472 = vmatprep.subr.mxu0 0.0
    %473 = vmatpush2.msra.mxu0 %v415
    %474 = vmatprep.subr.mxu0 0.0
    %475 = vmatpush2.msra.mxu0 %v414
    %476 = vmatprep.subr.mxu0 0.0
    %477 = vmatpush2.msra.mxu0 %v413
    %478 = vmatprep.subr.mxu0 0.0
    %479 = vmatpush2.msra.mxu0 %v412
    %480 = vmatprep.subr.mxu0 0.0
    %481 = vmatpush2.msra.mxu0 %v411
    %482 = vmatprep.subr.mxu0 0.0
    %483 = vmatpush2.msra.mxu0 %v410
    %484 = vmatprep.subr.mxu0 0.0
    %485 = vmatpush2.msra.mxu0 %v409
    %486 = vmatprep.subr.mxu0 0.0
    %487 = vmatpush2.msra.mxu0 %v408
    %488 = vmatprep.mubr.f32.mxu0 %v391
    %489 = vmatmul.mubr.f32.gmra.mxu0 %v390
    %v490 = vpop.f32.mrf.mxu0
    %v491 = vadd.f32 0.0, %v490
    %v492 = vpop.f32.mrf.mxu0
    %493 = vdwg.mxu0
    %vm494 = vcmask 261120
    %495 = vst.msk [vmem:[#allocation6] sm:$0xff] %vm494, %v491
    // Predicated region
    $region34: #{tpu_custom_call.1} parent=1 // pred_check
      _
    $region35: #{tpu_custom_call.1} parent=1 // pred_check_branch
      %497 = sbr.rel (0) target = $region37
    $region36: #{tpu_custom_call.1} parent=1 // pred_region
      %s499 = ssub.s32 128, 128
      %500 = vsyncadd [#allocation5], %s499
      %s502 = sshll.u32 [#allocation6], 4
      %s503 = int_to_ptr.vmem [resolvable:$true] %s502
      %505 = dma.vmem_to_hbm [thread:$0]  %s503, 128, %s7, [#allocation5]
    $region37: #{tpu_custom_call.1} parent=1 // pred_fallthru
      _
    // Predicated region
    $region38: #{tpu_custom_call.1} parent=1 // pred_check
      _
    $region39: #{tpu_custom_call.1} parent=1 // pred_check_branch
      %507 = sbr.rel (0) target = $region41
    $region40: #{tpu_custom_call.1} parent=1 // pred_region
      %508 = dma.done [#allocation5], 128
    $region41: #{tpu_custom_call.1} parent=1 // pred_fallthru
      _
    %509 = vsyncpa [#allocation4], 1
    %510 = vsyncpa [#allocation5], 1

</llo_original>
